<compile_context>
chip_gen: v7x
topology: tpu7x:2x2x1
jax: 0.10.0
libtpu: 0.0.40
codegen_flags: <defaults>
</compile_context>

<pallas_src>
import functools

import jax
import jax.numpy as jnp
from jax import lax
from jax.experimental import pallas as pl
from jax.experimental.pallas import tpu as pltpu

LN_EPS = 1e-5  # PyTorch nn.LayerNorm default


def _ln_relu(y, gamma, beta):
    """Two-pass LayerNorm over the last axis (f32), affine, then ReLU."""
    mean = jnp.mean(y, axis=-1, keepdims=True)
    centered = y - mean
    var = jnp.mean(centered * centered, axis=-1, keepdims=True)
    y = centered * lax.rsqrt(var + LN_EPS)
    return jnp.maximum(y * gamma + beta, 0.0)


def fused_forward_kernel(xs_ref, xt_ref,
                         w_in_ref, b_in_ref, g_in_ref, be_in_ref,
                         w_h_hbm, b_h_ref, g_h_ref, be_h_ref,
                         w_p2_ref, b_p2_ref, g_p2_ref, be_p2_ref,
                         w_fc_ref, b_fc_ref,
                         o_ref,
                         wbuf, sem, x_sc):
    n_hidden = w_h_hbm.shape[0]

    # Prefetch hidden layer 0's weights NOW so the DMA overlaps the input pipe.
    pltpu.make_async_copy(w_h_hbm.at[0], wbuf.at[0], sem.at[0]).start()

    # ---- input pipe: (x_source * x_target) @ W_in + b -> LN -> ReLU --------
    x = xs_ref[...] * xt_ref[...]                                  # f32 [B, E]
    y = jnp.dot(x.astype(jnp.bfloat16), w_in_ref[...],
                preferred_element_type=jnp.float32) + b_in_ref[...]
    x_sc[...] = _ln_relu(y, g_in_ref[...], be_in_ref[...])         # f32 [B, H1]

    # ---- 25 hidden layers: weights streamed from HBM, double-buffered ------
    @pl.loop(0, n_hidden)
    def _(i):
        slot = i % 2
        # Wait for this layer's weights.
        pltpu.make_async_copy(w_h_hbm.at[i], wbuf.at[slot], sem.at[slot]).wait()

        # Prefetch the next layer's weights into the other slot.
        @pl.when(i + 1 < n_hidden)
        def _():
            nxt = 1 - slot
            pltpu.make_async_copy(w_h_hbm.at[i + 1], wbuf.at[nxt],
                                  sem.at[nxt]).start()

        y = jnp.dot(x_sc[...].astype(jnp.bfloat16), wbuf[slot],
                    preferred_element_type=jnp.float32) + b_h_ref[pl.ds(i, 1), :]
        x_sc[...] = _ln_relu(y, g_h_ref[pl.ds(i, 1), :],
                             be_h_ref[pl.ds(i, 1), :])

    x = x_sc[...]                                                  # f32 [B, H1]

    # ---- pipe_2 -------------------------------------------------------------
    y = jnp.dot(x.astype(jnp.bfloat16), w_p2_ref[...],
                preferred_element_type=jnp.float32) + b_p2_ref[...]
    x = _ln_relu(y, g_p2_ref[...], be_p2_ref[...])                 # f32 [B, H2]

    # ---- fc3 head (lane-padded to 128 output columns) -----------------------
    o_ref[...] = jnp.dot(x.astype(jnp.bfloat16), w_fc_ref[...],
                         preferred_element_type=jnp.float32) + b_fc_ref[...]


# ----------------------------------------------------------------------------
# Parameter construction (deterministic, synthetic).
# ----------------------------------------------------------------------------
def init_params(key, embedding_dim, hidden1, hidden2, num_classes,
                n_hidden=25, padded_classes=128):
    def linear(key, fan_in, fan_out, pad_to=None):
        kw, kb = jax.random.split(key)
        bound = 1.0 / jnp.sqrt(fan_in)
        # stored as (in, out) == transpose of the PyTorch (out, in) weight
        w_t = jax.random.uniform(kw, (fan_in, fan_out), jnp.float32, -bound, bound)
        b = jax.random.uniform(kb, (1, fan_out), jnp.float32, -bound, bound)
        if pad_to is not None and pad_to > fan_out:
            w_t = jnp.pad(w_t, ((0, 0), (0, pad_to - fan_out)))
            b = jnp.pad(b, ((0, 0), (0, pad_to - fan_out)))
        return w_t.astype(jnp.bfloat16), b      # bf16 weights, f32 bias

    def ln(dim):
        return jnp.ones((1, dim), jnp.float32), jnp.zeros((1, dim), jnp.float32)

    keys = jax.random.split(key, n_hidden + 3)
    params = {}
    params["input"] = linear(keys[0], embedding_dim, hidden1) + ln(hidden1)

    hid_w, hid_b = [], []
    for i in range(n_hidden):
        w, b = linear(keys[1 + i], hidden1, hidden1)
        hid_w.append(w)
        hid_b.append(b[0])                      # (H1,) -> dense 2-D stack below
    params["hidden"] = (
        jnp.stack(hid_w),                                      # [L, H1, H1] bf16 (HBM)
        jnp.stack(hid_b),                                      # [L, H1] f32
        jnp.ones((n_hidden, hidden1), jnp.float32),            # gamma [L, H1]
        jnp.zeros((n_hidden, hidden1), jnp.float32),           # beta  [L, H1]
    )

    params["pipe2"] = linear(keys[n_hidden + 1], hidden1, hidden2) + ln(hidden2)
    params["fc3"] = linear(keys[n_hidden + 2], hidden2, num_classes,
                           pad_to=padded_classes)
    return params


# ----------------------------------------------------------------------------
# Forward pass: one fused pallas_call, slice padded logits in the wrapper.
# ----------------------------------------------------------------------------
@functools.partial(jax.jit, static_argnames=("num_classes",))
def node2vec_classifier_forward(params, x_source, x_target, *, num_classes):
    B = x_source.shape[0]
    w_h, b_h, g_h, be_h = params["hidden"]
    n_hidden, hidden1, _ = w_h.shape
    padded_classes = params["fc3"][0].shape[1]

    vmem = pl.BlockSpec(memory_space=pltpu.MemorySpace.VMEM)
    hbm = pl.BlockSpec(memory_space=pl.ANY)      # hidden weights stay in HBM

    in_specs = [vmem, vmem,                       # x_source, x_target
                vmem, vmem, vmem, vmem,           # input pipe
                hbm, vmem, vmem, vmem,            # hidden: W (HBM), b/gamma/beta
                vmem, vmem, vmem, vmem,           # pipe_2
                vmem, vmem]                       # fc3

    logits_padded = pl.pallas_call(
        fused_forward_kernel,
        out_shape=jax.ShapeDtypeStruct((B, padded_classes), jnp.float32),
        in_specs=in_specs,
        out_specs=vmem,
        scratch_shapes=[
            pltpu.VMEM((2, hidden1, hidden1), jnp.bfloat16),   # weight double buffer
            pltpu.SemaphoreType.DMA((2,)),
            pltpu.VMEM((B, hidden1), jnp.float32),             # resident activation
        ],
        compiler_params=pltpu.CompilerParams(vmem_limit_bytes=16 << 20),
    )(x_source, x_target,
      *params["input"], w_h, b_h, g_h, be_h, *params["pipe2"], *params["fc3"])

    return logits_padded[:, :num_classes]


# ----------------------------------------------------------------------------
# Pure-JAX reference (same bf16 weight / activation casts) for a tolerance test.
# ----------------------------------------------------------------------------
def reference_forward(params, x_source, x_target, num_classes):
    def ln_relu(y, g, b):
        return _ln_relu(y, g, b)

    def dense(x, w_bf16, b):
        return jnp.dot(x.astype(jnp.bfloat16), w_bf16,
                       preferred_element_type=jnp.float32) + b

    w_in, b_in, g_in, be_in = params["input"]
    w_h, b_h, g_h, be_h = params["hidden"]
    w_p2, b_p2, g_p2, be_p2 = params["pipe2"]
    w_fc, b_fc = params["fc3"]

    x = x_source * x_target
    x = ln_relu(dense(x, w_in, b_in), g_in, be_in)
    for i in range(w_h.shape[0]):
        x = ln_relu(dense(x, w_h[i], b_h[i][None, :]),
                    g_h[i][None, :], be_h[i][None, :])
    x = ln_relu(dense(x, w_p2, b_p2), g_p2, be_p2)
    logits = dense(x, w_fc, b_fc)
    return logits[:, :num_classes]


if __name__ == "__main__":
    # Small shapes consistent with the module structure.
    B = 8
    EMBEDDING_DIM = 128
    HIDDEN1 = 256
    HIDDEN2 = 128
    NUM_CLASSES = 2

    key = jax.random.PRNGKey(0)
    kp, ks, kt = jax.random.split(key, 3)

    params = init_params(kp, EMBEDDING_DIM, HIDDEN1, HIDDEN2, NUM_CLASSES)
    x_source = jax.random.normal(ks, (B, EMBEDDING_DIM), jnp.float32)
    x_target = jax.random.normal(kt, (B, EMBEDDING_DIM), jnp.float32)

    logits = node2vec_classifier_forward(params, x_source, x_target,
                                         num_classes=NUM_CLASSES)
    jax.block_until_ready(logits)

    assert logits.shape == (B, NUM_CLASSES)
    assert logits.dtype == jnp.float32
    assert bool(jnp.all(jnp.isfinite(logits)))

    ref = reference_forward(params, x_source, x_target, NUM_CLASSES)
    max_err = float(jnp.max(jnp.abs(logits - ref)))
    assert max_err < 5e-2, f"kernel vs reference mismatch: {max_err}"

    print("KERNEL_OK")
</pallas_src>

<mosaic_0001>
module attributes {stable_mosaic.version = 11 : i64} {
  func.func @fused_forward_kernel(%arg0: memref<8x128xf32, #tpu.memory_space<vmem>>, %arg1: memref<8x128xf32, #tpu.memory_space<vmem>>, %arg2: memref<128x256xbf16, #tpu.memory_space<vmem>>, %arg3: memref<1x256xf32, #tpu.memory_space<vmem>>, %arg4: memref<1x256xf32, #tpu.memory_space<vmem>>, %arg5: memref<1x256xf32, #tpu.memory_space<vmem>>, %arg6: memref<25x256x256xbf16, #tpu.memory_space<any>>, %arg7: memref<25x256xf32, #tpu.memory_space<vmem>>, %arg8: memref<25x256xf32, #tpu.memory_space<vmem>>, %arg9: memref<25x256xf32, #tpu.memory_space<vmem>>, %arg10: memref<256x128xbf16, #tpu.memory_space<vmem>>, %arg11: memref<1x128xf32, #tpu.memory_space<vmem>>, %arg12: memref<1x128xf32, #tpu.memory_space<vmem>>, %arg13: memref<1x128xf32, #tpu.memory_space<vmem>>, %arg14: memref<128x128xbf16, #tpu.memory_space<vmem>>, %arg15: memref<1x128xf32, #tpu.memory_space<vmem>>, %arg16: memref<8x128xf32, #tpu.memory_space<vmem>>, %arg17: memref<2x256x256xbf16, #tpu.memory_space<vmem>>, %arg18: memref<2x!tpu.dma_semaphore, #tpu.memory_space<semaphore_mem>>, %arg19: memref<8x256xf32, #tpu.memory_space<vmem>>) attributes {dimension_semantics = [], scalar_prefetch = 0 : i64, scratch_operands = 3 : i64, tpu.core_type = #tpu.core_type<tc>} {
    %c0_i32 = arith.constant 0 : i32
    %c0_i32_0 = arith.constant 0 : i32
    %c0_i32_1 = arith.constant 0 : i32
    %c0_i32_2 = arith.constant 0 : i32
    %c0_i32_3 = arith.constant 0 : i32
    %0 = tpu.memref_slice %arg6[%c0_i32, %c0_i32_2, %c0_i32_3] : memref<25x256x256xbf16, #tpu.memory_space<any>> -> memref<1x256x256xbf16, #tpu.memory_space<any>>
    %1 = tpu.memref_squeeze %0 : memref<1x256x256xbf16, #tpu.memory_space<any>> -> memref<256x256xbf16, #tpu.memory_space<any>>
    %c0_i32_4 = arith.constant 0 : i32
    %c0_i32_5 = arith.constant 0 : i32
    %2 = tpu.memref_slice %arg17[%c0_i32_0, %c0_i32_4, %c0_i32_5] : memref<2x256x256xbf16, #tpu.memory_space<vmem>> -> memref<1x256x256xbf16, #tpu.memory_space<vmem>>
    %3 = tpu.memref_squeeze %2 : memref<1x256x256xbf16, #tpu.memory_space<vmem>> -> memref<256x256xbf16, #tpu.memory_space<vmem>>
    %4 = tpu.memref_slice %arg18[%c0_i32_1] : memref<2x!tpu.dma_semaphore, #tpu.memory_space<semaphore_mem>> -> memref<1x!tpu.dma_semaphore, #tpu.memory_space<semaphore_mem>>
    %5 = tpu.memref_squeeze %4 : memref<1x!tpu.dma_semaphore, #tpu.memory_space<semaphore_mem>> -> memref<!tpu.dma_semaphore, #tpu.memory_space<semaphore_mem>>
    tpu.enqueue_dma source(%1 : memref<256x256xbf16, #tpu.memory_space<any>>) target(%3 : memref<256x256xbf16, #tpu.memory_space<vmem>>) target_semaphore(%5 : memref<!tpu.dma_semaphore, #tpu.memory_space<semaphore_mem>>)
    %c0 = arith.constant 0 : index
    %c0_6 = arith.constant 0 : index
    %6 = vector.load %arg0[%c0, %c0_6] : memref<8x128xf32, #tpu.memory_space<vmem>>, vector<8x128xf32>
    %c0_7 = arith.constant 0 : index
    %c0_8 = arith.constant 0 : index
    %7 = vector.load %arg1[%c0_7, %c0_8] : memref<8x128xf32, #tpu.memory_space<vmem>>, vector<8x128xf32>
    %8 = arith.mulf %6, %7 : vector<8x128xf32>
    %9 = arith.truncf %8 : vector<8x128xf32> to vector<8x128xbf16>
    %c0_9 = arith.constant 0 : index
    %c0_10 = arith.constant 0 : index
    %10 = vector.load %arg2[%c0_9, %c0_10] : memref<128x256xbf16, #tpu.memory_space<vmem>>, vector<128x256xbf16>
    %cst = arith.constant dense<0.000000e+00> : vector<8x256xf32>
    %11 = tpu.matmul %9, %10, %cst {dimension_numbers = #tpu.dot_dimension_numbers<[1], [0], [0], [1], [0, 0, 1, 1], [], []>} : vector<8x128xbf16>, vector<128x256xbf16>, vector<8x256xf32> -> vector<8x256xf32>
    %c0_11 = arith.constant 0 : index
    %c0_12 = arith.constant 0 : index
    %12 = vector.load %arg3[%c0_11, %c0_12] : memref<1x256xf32, #tpu.memory_space<vmem>>, vector<1x256xf32>
    %13 = vector.broadcast %12 : vector<1x256xf32> to vector<8x256xf32>
    %14 = arith.addf %11, %13 : vector<8x256xf32>
    %c0_13 = arith.constant 0 : index
    %c0_14 = arith.constant 0 : index
    %15 = vector.load %arg4[%c0_13, %c0_14] : memref<1x256xf32, #tpu.memory_space<vmem>>, vector<1x256xf32>
    %c0_15 = arith.constant 0 : index
    %c0_16 = arith.constant 0 : index
    %16 = vector.load %arg5[%c0_15, %c0_16] : memref<1x256xf32, #tpu.memory_space<vmem>>, vector<1x256xf32>
    %cst_17 = arith.constant dense<0.000000e+00> : vector<8xf32>
    %17 = vector.multi_reduction <add>, %14, %cst_17 [1] : vector<8x256xf32> to vector<8xf32>
    %18 = vector.shape_cast %17 : vector<8xf32> to vector<8x1xf32>
    %cst_18 = arith.constant 2.560000e+02 : f32
    %19 = vector.broadcast %cst_18 : f32 to vector<8x1xf32>
    %20 = arith.divf %18, %19 : vector<8x1xf32>
    %21 = vector.broadcast %20 : vector<8x1xf32> to vector<8x256xf32>
    %22 = arith.subf %14, %21 : vector<8x256xf32>
    %23 = arith.mulf %22, %22 : vector<8x256xf32>
    %cst_19 = arith.constant dense<0.000000e+00> : vector<8xf32>
    %24 = vector.multi_reduction <add>, %23, %cst_19 [1] : vector<8x256xf32> to vector<8xf32>
    %25 = vector.shape_cast %24 : vector<8xf32> to vector<8x1xf32>
    %cst_20 = arith.constant 2.560000e+02 : f32
    %26 = vector.broadcast %cst_20 : f32 to vector<8x1xf32>
    %27 = arith.divf %25, %26 : vector<8x1xf32>
    %cst_21 = arith.constant 9.99999974E-6 : f32
    %28 = vector.broadcast %cst_21 : f32 to vector<8x1xf32>
    %29 = arith.addf %27, %28 : vector<8x1xf32>
    %30 = math.rsqrt %29 : vector<8x1xf32>
    %31 = vector.broadcast %30 : vector<8x1xf32> to vector<8x256xf32>
    %32 = arith.mulf %22, %31 : vector<8x256xf32>
    %33 = vector.broadcast %15 : vector<1x256xf32> to vector<8x256xf32>
    %34 = arith.mulf %32, %33 : vector<8x256xf32>
    %35 = vector.broadcast %16 : vector<1x256xf32> to vector<8x256xf32>
    %36 = arith.addf %34, %35 : vector<8x256xf32>
    %cst_22 = arith.constant 0.000000e+00 : f32
    %37 = vector.broadcast %cst_22 : f32 to vector<8x256xf32>
    %38 = arith.maximumf %36, %37 : vector<8x256xf32>
    %c0_23 = arith.constant 0 : index
    %c0_24 = arith.constant 0 : index
    %39 = vector.load %arg19[%c0_23, %c0_24] : memref<8x256xf32, #tpu.memory_space<vmem>>, vector<8x256xf32>
    tpu.vector_store %arg19[%c0_23, %c0_24], %38 {strides = array<i32>} : memref<8x256xf32, #tpu.memory_space<vmem>>, vector<8x256xf32>,
    %c0_i32_25 = arith.constant 0 : i32
    %c25_i32 = arith.constant 25 : i32
    %40 = arith.addi %c0_i32_25, %c25_i32 : i32
    %c1_i32 = arith.constant 1 : i32
    scf.for %arg20 = %c0_i32_25 to %40 step %c1_i32  : i32 {
      %c1_i32_51 = arith.constant 1 : i32
      %79 = arith.muli %arg20, %c1_i32_51 : i32
      %c0_i32_52 = arith.constant 0 : i32
      %80 = arith.addi %c0_i32_52, %79 : i32
      %c2_i32 = arith.constant 2 : i32
      %c0_i32_53 = arith.constant 0 : i32
      %81 = arith.cmpi eq, %c2_i32, %c0_i32_53 : i32
      %c1_i32_54 = arith.constant 1 : i32
      %82 = arith.select %81, %c1_i32_54, %c2_i32 : i32
      %83 = arith.remsi %80, %82 : i32
      %c0_i32_55 = arith.constant 0 : i32
      %84 = arith.cmpi ne, %83, %c0_i32_55 : i32
      %c0_i32_56 = arith.constant 0 : i32
      %85 = arith.cmpi slt, %83, %c0_i32_56 : i32
      %c0_i32_57 = arith.constant 0 : i32
      %86 = arith.cmpi slt, %82, %c0_i32_57 : i32
      %87 = arith.xori %85, %86 : i1
      %88 = arith.andi %87, %84 : i1
      %89 = arith.addi %83, %82 : i32
      %90 = arith.select %88, %89, %83 : i32
      %c0_i32_58 = arith.constant 0 : i32
      %c0_i32_59 = arith.constant 0 : i32
      %91 = tpu.memref_slice %arg6[%80, %c0_i32_58, %c0_i32_59] : memref<25x256x256xbf16, #tpu.memory_space<any>> -> memref<1x256x256xbf16, #tpu.memory_space<any>>
      %92 = tpu.memref_squeeze %91 : memref<1x256x256xbf16, #tpu.memory_space<any>> -> memref<256x256xbf16, #tpu.memory_space<any>>
      %c0_i32_60 = arith.constant 0 : i32
      %c0_i32_61 = arith.constant 0 : i32
      %93 = tpu.memref_slice %arg17[%90, %c0_i32_60, %c0_i32_61] : memref<2x256x256xbf16, #tpu.memory_space<vmem>> -> memref<1x256x256xbf16, #tpu.memory_space<vmem>>
      %94 = tpu.memref_squeeze %93 : memref<1x256x256xbf16, #tpu.memory_space<vmem>> -> memref<256x256xbf16, #tpu.memory_space<vmem>>
      %95 = tpu.memref_slice %arg18[%90] : memref<2x!tpu.dma_semaphore, #tpu.memory_space<semaphore_mem>> -> memref<1x!tpu.dma_semaphore, #tpu.memory_space<semaphore_mem>>
      %96 = tpu.memref_squeeze %95 : memref<1x!tpu.dma_semaphore, #tpu.memory_space<semaphore_mem>> -> memref<!tpu.dma_semaphore, #tpu.memory_space<semaphore_mem>>
      tpu.wait_dma2 semaphore(%96 : memref<!tpu.dma_semaphore, #tpu.memory_space<semaphore_mem>>) src(%92 : memref<256x256xbf16, #tpu.memory_space<any>>) dst(%94 : memref<256x256xbf16, #tpu.memory_space<vmem>>)
      %c1_i32_62 = arith.constant 1 : i32
      %97 = arith.addi %80, %c1_i32_62 : i32
      %c25_i32_63 = arith.constant 25 : i32
      %98 = arith.cmpi slt, %97, %c25_i32_63 : i32
      %99 = arith.extui %98 : i1 to i32
      %c0_i32_64 = arith.constant 0 : i32
      %100 = arith.cmpi ne, %99, %c0_i32_64 : i32
      scf.if %100 {
        %c1_i32_81 = arith.constant 1 : i32
        %138 = arith.subi %c1_i32_81, %90 : i32
        %c1_i32_82 = arith.constant 1 : i32
        %139 = arith.addi %80, %c1_i32_82 : i32
        %c0_i32_83 = arith.constant 0 : i32
        %c0_i32_84 = arith.constant 0 : i32
        %140 = tpu.memref_slice %arg6[%139, %c0_i32_83, %c0_i32_84] : memref<25x256x256xbf16, #tpu.memory_space<any>> -> memref<1x256x256xbf16, #tpu.memory_space<any>>
        %141 = tpu.memref_squeeze %140 : memref<1x256x256xbf16, #tpu.memory_space<any>> -> memref<256x256xbf16, #tpu.memory_space<any>>
        %c0_i32_85 = arith.constant 0 : i32
        %c0_i32_86 = arith.constant 0 : i32
        %142 = tpu.memref_slice %arg17[%138, %c0_i32_85, %c0_i32_86] : memref<2x256x256xbf16, #tpu.memory_space<vmem>> -> memref<1x256x256xbf16, #tpu.memory_space<vmem>>
        %143 = tpu.memref_squeeze %142 : memref<1x256x256xbf16, #tpu.memory_space<vmem>> -> memref<256x256xbf16, #tpu.memory_space<vmem>>
        %144 = tpu.memref_slice %arg18[%138] : memref<2x!tpu.dma_semaphore, #tpu.memory_space<semaphore_mem>> -> memref<1x!tpu.dma_semaphore, #tpu.memory_space<semaphore_mem>>
        %145 = tpu.memref_squeeze %144 : memref<1x!tpu.dma_semaphore, #tpu.memory_space<semaphore_mem>> -> memref<!tpu.dma_semaphore, #tpu.memory_space<semaphore_mem>>
        tpu.enqueue_dma source(%141 : memref<256x256xbf16, #tpu.memory_space<any>>) target(%143 : memref<256x256xbf16, #tpu.memory_space<vmem>>) target_semaphore(%145 : memref<!tpu.dma_semaphore, #tpu.memory_space<semaphore_mem>>)
      } else {
      }
      %c0_65 = arith.constant 0 : index
      %c0_66 = arith.constant 0 : index
      %101 = vector.load %arg19[%c0_65, %c0_66] : memref<8x256xf32, #tpu.memory_space<vmem>>, vector<8x256xf32>
      %102 = arith.truncf %101 : vector<8x256xf32> to vector<8x256xbf16>
      %103 = arith.index_cast %90 : i32 to index
      %c0_67 = arith.constant 0 : index
      %c0_68 = arith.constant 0 : index
      %104 = vector.load %arg17[%103, %c0_67, %c0_68] : memref<2x256x256xbf16, #tpu.memory_space<vmem>>, vector<1x256x256xbf16>
      %105 = vector.shape_cast %104 : vector<1x256x256xbf16> to vector<256x256xbf16>
      %cst_69 = arith.constant dense<0.000000e+00> : vector<8x256xf32>
      %106 = tpu.matmul %102, %105, %cst_69 {dimension_numbers = #tpu.dot_dimension_numbers<[1], [0], [0], [1], [0, 0, 1, 1], [], []>} : vector<8x256xbf16>, vector<256x256xbf16>, vector<8x256xf32> -> vector<8x256xf32>
      %107 = arith.index_cast %80 : i32 to index
      %c0_70 = arith.constant 0 : index
      %108 = vector.load %arg7[%107, %c0_70] : memref<25x256xf32, #tpu.memory_space<vmem>>, vector<1x256xf32>
      %109 = vector.broadcast %108 : vector<1x256xf32> to vector<8x256xf32>
      %110 = arith.addf %106, %109 : vector<8x256xf32>
      %111 = arith.index_cast %80 : i32 to index
      %c0_71 = arith.constant 0 : index
      %112 = vector.load %arg8[%111, %c0_71] : memref<25x256xf32, #tpu.memory_space<vmem>>, vector<1x256xf32>
      %113 = arith.index_cast %80 : i32 to index
      %c0_72 = arith.constant 0 : index
      %114 = vector.load %arg9[%113, %c0_72] : memref<25x256xf32, #tpu.memory_space<vmem>>, vector<1x256xf32>
      %cst_73 = arith.constant dense<0.000000e+00> : vector<8xf32>
      %115 = vector.multi_reduction <add>, %110, %cst_73 [1] : vector<8x256xf32> to vector<8xf32>
      %116 = vector.shape_cast %115 : vector<8xf32> to vector<8x1xf32>
      %cst_74 = arith.constant 2.560000e+02 : f32
      %117 = vector.broadcast %cst_74 : f32 to vector<8x1xf32>
      %118 = arith.divf %116, %117 : vector<8x1xf32>
      %119 = vector.broadcast %118 : vector<8x1xf32> to vector<8x256xf32>
      %120 = arith.subf %110, %119 : vector<8x256xf32>
      %121 = arith.mulf %120, %120 : vector<8x256xf32>
      %cst_75 = arith.constant dense<0.000000e+00> : vector<8xf32>
      %122 = vector.multi_reduction <add>, %121, %cst_75 [1] : vector<8x256xf32> to vector<8xf32>
      %123 = vector.shape_cast %122 : vector<8xf32> to vector<8x1xf32>
      %cst_76 = arith.constant 2.560000e+02 : f32
      %124 = vector.broadcast %cst_76 : f32 to vector<8x1xf32>
      %125 = arith.divf %123, %124 : vector<8x1xf32>
      %cst_77 = arith.constant 9.99999974E-6 : f32
      %126 = vector.broadcast %cst_77 : f32 to vector<8x1xf32>
      %127 = arith.addf %125, %126 : vector<8x1xf32>
      %128 = math.rsqrt %127 : vector<8x1xf32>
      %129 = vector.broadcast %128 : vector<8x1xf32> to vector<8x256xf32>
      %130 = arith.mulf %120, %129 : vector<8x256xf32>
      %131 = vector.broadcast %112 : vector<1x256xf32> to vector<8x256xf32>
      %132 = arith.mulf %130, %131 : vector<8x256xf32>
      %133 = vector.broadcast %114 : vector<1x256xf32> to vector<8x256xf32>
      %134 = arith.addf %132, %133 : vector<8x256xf32>
      %cst_78 = arith.constant 0.000000e+00 : f32
      %135 = vector.broadcast %cst_78 : f32 to vector<8x256xf32>
      %136 = arith.maximumf %134, %135 : vector<8x256xf32>
      %c0_79 = arith.constant 0 : index
      %c0_80 = arith.constant 0 : index
      %137 = vector.load %arg19[%c0_79, %c0_80] : memref<8x256xf32, #tpu.memory_space<vmem>>, vector<8x256xf32>
      tpu.vector_store %arg19[%c0_79, %c0_80], %136 {strides = array<i32>} : memref<8x256xf32, #tpu.memory_space<vmem>>, vector<8x256xf32>,
    }
    %c25_i32_26 = arith.constant 25 : i32
    %c0_27 = arith.constant 0 : index
    %c0_28 = arith.constant 0 : index
    %41 = vector.load %arg19[%c0_27, %c0_28] : memref<8x256xf32, #tpu.memory_space<vmem>>, vector<8x256xf32>
    %42 = arith.truncf %41 : vector<8x256xf32> to vector<8x256xbf16>
    %c0_29 = arith.constant 0 : index
    %c0_30 = arith.constant 0 : index
    %43 = vector.load %arg10[%c0_29, %c0_30] : memref<256x128xbf16, #tpu.memory_space<vmem>>, vector<256x128xbf16>
    %cst_31 = arith.constant dense<0.000000e+00> : vector<8x128xf32>
    %44 = tpu.matmul %42, %43, %cst_31 {dimension_numbers = #tpu.dot_dimension_numbers<[1], [0], [0], [1], [0, 0, 1, 1], [], []>} : vector<8x256xbf16>, vector<256x128xbf16>, vector<8x128xf32> -> vector<8x128xf32>
    %c0_32 = arith.constant 0 : index
    %c0_33 = arith.constant 0 : index
    %45 = vector.load %arg11[%c0_32, %c0_33] : memref<1x128xf32, #tpu.memory_space<vmem>>, vector<1x128xf32>
    %46 = vector.broadcast %45 : vector<1x128xf32> to vector<8x128xf32>
    %47 = arith.addf %44, %46 : vector<8x128xf32>
    %c0_34 = arith.constant 0 : index
    %c0_35 = arith.constant 0 : index
    %48 = vector.load %arg12[%c0_34, %c0_35] : memref<1x128xf32, #tpu.memory_space<vmem>>, vector<1x128xf32>
    %c0_36 = arith.constant 0 : index
    %c0_37 = arith.constant 0 : index
    %49 = vector.load %arg13[%c0_36, %c0_37] : memref<1x128xf32, #tpu.memory_space<vmem>>, vector<1x128xf32>
    %cst_38 = arith.constant dense<0.000000e+00> : vector<8xf32>
    %50 = vector.multi_reduction <add>, %47, %cst_38 [1] : vector<8x128xf32> to vector<8xf32>
    %51 = vector.shape_cast %50 : vector<8xf32> to vector<8x1xf32>
    %cst_39 = arith.constant 1.280000e+02 : f32
    %52 = vector.broadcast %cst_39 : f32 to vector<8x1xf32>
    %53 = arith.divf %51, %52 : vector<8x1xf32>
    %54 = vector.broadcast %53 : vector<8x1xf32> to vector<8x128xf32>
    %55 = arith.subf %47, %54 : vector<8x128xf32>
    %56 = arith.mulf %55, %55 : vector<8x128xf32>
    %cst_40 = arith.constant dense<0.000000e+00> : vector<8xf32>
    %57 = vector.multi_reduction <add>, %56, %cst_40 [1] : vector<8x128xf32> to vector<8xf32>
    %58 = vector.shape_cast %57 : vector<8xf32> to vector<8x1xf32>
    %cst_41 = arith.constant 1.280000e+02 : f32
    %59 = vector.broadcast %cst_41 : f32 to vector<8x1xf32>
    %60 = arith.divf %58, %59 : vector<8x1xf32>
    %cst_42 = arith.constant 9.99999974E-6 : f32
    %61 = vector.broadcast %cst_42 : f32 to vector<8x1xf32>
    %62 = arith.addf %60, %61 : vector<8x1xf32>
    %63 = math.rsqrt %62 : vector<8x1xf32>
    %64 = vector.broadcast %63 : vector<8x1xf32> to vector<8x128xf32>
    %65 = arith.mulf %55, %64 : vector<8x128xf32>
    %66 = vector.broadcast %48 : vector<1x128xf32> to vector<8x128xf32>
    %67 = arith.mulf %65, %66 : vector<8x128xf32>
    %68 = vector.broadcast %49 : vector<1x128xf32> to vector<8x128xf32>
    %69 = arith.addf %67, %68 : vector<8x128xf32>
    %cst_43 = arith.constant 0.000000e+00 : f32
    %70 = vector.broadcast %cst_43 : f32 to vector<8x128xf32>
    %71 = arith.maximumf %69, %70 : vector<8x128xf32>
    %72 = arith.truncf %71 : vector<8x128xf32> to vector<8x128xbf16>
    %c0_44 = arith.constant 0 : index
    %c0_45 = arith.constant 0 : index
    %73 = vector.load %arg14[%c0_44, %c0_45] : memref<128x128xbf16, #tpu.memory_space<vmem>>, vector<128x128xbf16>
    %cst_46 = arith.constant dense<0.000000e+00> : vector<8x128xf32>
    %74 = tpu.matmul %72, %73, %cst_46 {dimension_numbers = #tpu.dot_dimension_numbers<[1], [0], [0], [1], [0, 0, 1, 1], [], []>} : vector<8x128xbf16>, vector<128x128xbf16>, vector<8x128xf32> -> vector<8x128xf32>
    %c0_47 = arith.constant 0 : index
    %c0_48 = arith.constant 0 : index
    %75 = vector.load %arg15[%c0_47, %c0_48] : memref<1x128xf32, #tpu.memory_space<vmem>>, vector<1x128xf32>
    %76 = vector.broadcast %75 : vector<1x128xf32> to vector<8x128xf32>
    %77 = arith.addf %74, %76 : vector<8x128xf32>
    %c0_49 = arith.constant 0 : index
    %c0_50 = arith.constant 0 : index
    %78 = vector.load %arg16[%c0_49, %c0_50] : memref<8x128xf32, #tpu.memory_space<vmem>>, vector<8x128xf32>
    tpu.vector_store %arg16[%c0_49, %c0_50], %77 {strides = array<i32>} : memref<8x128xf32, #tpu.memory_space<vmem>>, vector<8x128xf32>,
    return
  }
}

</mosaic_0001>

<llo_original>
// kernel: node2vec_classifier_forward.1
$region0: #{node2vec_classifier_forward.1}
  #allocation0 [shape = 'u32[]', space=smem, size = 0x4, offset = 0x4, fixed_abs, tag = 'smem constant byte address 0x4 - core index']
  #allocation1 [shape = 'u32[144,128]{1,0:T(1,128)}', space=vmem, size = 0x12000, scoped, tag = 'internal scratch']
  #allocation2 [shape = 'bf16[2,256,256]{2,1,0:T(16,128)(2,1)}', space=vmem, size = 0x40000, scoped, tag = 'scratch operand']
  #allocation3 [shape = 's32[2]{0}', space=sflag, size = 0x8, scoped, tag = 'scratch operand']
  #allocation4 [shape = 'f32[8,256]{1,0:T(8,128)}', space=vmem, size = 0x2000, scoped, tag = 'scratch operand']
  #allocation28 [shape = 's32[]', space=sflag, size = 0x4, offset = 0, fixed_abs, tag = 'sflag constant byte address 0x0 - dummy sync flag']
  #allocation30 [shape = 's32[]', space=sflag, size = 0x4, offset = 0, fixed_abs, tag = 'sflag constant byte address 0x0 - dummy sync flag']
  %s0 = inlined_call_operand.hbm [shape: f32[8,128], index: 0, kind: input, shape index: {}]
  %s1 = inlined_call_operand.hbm [shape: f32[8,128], index: 1, kind: input, shape index: {}]
  %s2 = inlined_call_operand.hbm [shape: bf16[128,256], index: 2, kind: input, shape index: {}]
  %s3 = inlined_call_operand.hbm [shape: f32[1,256], index: 3, kind: input, shape index: {}]
  %s4 = inlined_call_operand.hbm [shape: f32[1,256], index: 4, kind: input, shape index: {}]
  %s5 = inlined_call_operand.hbm [shape: f32[1,256], index: 5, kind: input, shape index: {}]
  %s6 = inlined_call_operand.hbm [shape: bf16[25,256,256], index: 6, kind: input, shape index: {}]
  %s7 = inlined_call_operand.hbm [shape: f32[25,256], index: 7, kind: input, shape index: {}]
  %s8 = inlined_call_operand.hbm [shape: f32[25,256], index: 8, kind: input, shape index: {}]
  %s9 = inlined_call_operand.hbm [shape: f32[25,256], index: 9, kind: input, shape index: {}]
  %s10 = inlined_call_operand.hbm [shape: bf16[256,128], index: 10, kind: input, shape index: {}]
  %s11 = inlined_call_operand.hbm [shape: f32[1,128], index: 11, kind: input, shape index: {}]
  %s12 = inlined_call_operand.hbm [shape: f32[1,128], index: 12, kind: input, shape index: {}]
  %s13 = inlined_call_operand.hbm [shape: f32[1,128], index: 13, kind: input, shape index: {}]
  %s14 = inlined_call_operand.hbm [shape: bf16[128,128], index: 14, kind: input, shape index: {}]
  %s15 = inlined_call_operand.hbm [shape: f32[1,128], index: 15, kind: input, shape index: {}]
  %s16 = inlined_call_operand.vmem [shape: f32[8,128], index: 16, kind: output, shape index: {}]
  %s17 = sld [smem:[#allocation0]]
  $region141: #{node2vec_classifier_forward.1} parent=0
    _
  %s19 = ssub.s32 1, %s17
  %s20 = scalar_select 0, %s19, %s17
  $region1: #{node2vec_classifier_forward.1} parent=0
    #allocation5 [shape = 'u8[4096]{0}', space=vmem, size = 0x1000, scoped, tag = 'input window, operand 0, single buffered']
    #allocation6 [shape = 's32[1]{0}', space=sflag, size = 0x4, scoped, tag = 'scoped memory for node2vec_classifier_forward.1']
    #allocation7 [shape = 'u8[4096]{0}', space=vmem, size = 0x1000, scoped, tag = 'input window, operand 1, single buffered']
    #allocation8 [shape = 's32[1]{0}', space=sflag, size = 0x4, scoped, tag = 'scoped memory for node2vec_classifier_forward.1']
    #allocation9 [shape = 'u8[65536]{0}', space=vmem, size = 0x10000, scoped, tag = 'input window, operand 2, single buffered']
    #allocation10 [shape = 'u8[1024]{0}', space=vmem, size = 0x400, scoped, tag = 'input window, operand 3, single buffered']
    #allocation11 [shape = 's32[1]{0}', space=sflag, size = 0x4, scoped, tag = 'scoped memory for node2vec_classifier_forward.1']
    #allocation12 [shape = 'u8[1024]{0}', space=vmem, size = 0x400, scoped, tag = 'input window, operand 4, single buffered']
    #allocation13 [shape = 'u8[1024]{0}', space=vmem, size = 0x400, scoped, tag = 'input window, operand 5, single buffered']
    #allocation14 [shape = 's32[1]{0}', space=sflag, size = 0x4, scoped, tag = 'scoped memory for node2vec_classifier_forward.1']
    #allocation15 [shape = 'u8[32768]{0}', space=vmem, size = 0x8000, scoped, tag = 'input window, operand 7, single buffered']
    #allocation16 [shape = 'u8[32768]{0}', space=vmem, size = 0x8000, scoped, tag = 'input window, operand 8, single buffered']
    #allocation17 [shape = 's32[1]{0}', space=sflag, size = 0x4, scoped, tag = 'scoped memory for node2vec_classifier_forward.1']
    #allocation18 [shape = 'u8[32768]{0}', space=vmem, size = 0x8000, scoped, tag = 'input window, operand 9, single buffered']
    #allocation19 [shape = 'u8[65536]{0}', space=vmem, size = 0x10000, scoped, tag = 'input window, operand 10, single buffered']
    #allocation20 [shape = 's32[1]{0}', space=sflag, size = 0x4, scoped, tag = 'scoped memory for node2vec_classifier_forward.1']
    #allocation21 [shape = 'u8[512]{0}', space=vmem, size = 0x400, scoped, tag = 'input window, operand 11, single buffered']
    #allocation22 [shape = 'u8[512]{0}', space=vmem, size = 0x400, scoped, tag = 'input window, operand 12, single buffered']
    #allocation23 [shape = 's32[1]{0}', space=sflag, size = 0x4, scoped, tag = 'scoped memory for node2vec_classifier_forward.1']
    #allocation24 [shape = 'u8[512]{0}', space=vmem, size = 0x400, scoped, tag = 'input window, operand 13, single buffered']
    #allocation25 [shape = 'u8[32768]{0}', space=vmem, size = 0x8000, scoped, tag = 'input window, operand 14, single buffered']
    #allocation26 [shape = 's32[1]{0}', space=sflag, size = 0x4, scoped, tag = 'scoped memory for node2vec_classifier_forward.1']
    #allocation27 [shape = 'u8[512]{0}', space=vmem, size = 0x400, scoped, tag = 'input window, operand 15, single buffered']
    #allocation29 [shape = 'u32[9]{0}', space=smem, size = 0x24, scoped, tag = 'DMA stride descriptor']
    %21 = vsyncpa [#allocation6], 0
    %22 = vsyncpa [#allocation8], 0
    %23 = vsyncpa [#allocation11], 0
    %24 = vsyncpa [#allocation14], 0
    %25 = vsyncpa [#allocation17], 0
    %26 = vsyncpa [#allocation20], 0
    %27 = vsyncpa [#allocation23], 0
    %28 = vsyncpa [#allocation26], 0
    // Predicated region
    $region2: #{node2vec_classifier_forward.1} parent=1 // pred_check
      _
    $region3: #{node2vec_classifier_forward.1} parent=1 // pred_check_branch
      %30 = sbr.rel (0) target = $region5
    $region4: #{node2vec_classifier_forward.1} parent=1 // pred_region
      %s32 = ssub.s32 128, 128
      %33 = vsyncadd [#allocation6], %s32
      %s35 = sshll.u32 [#allocation5], 4
      %s36 = int_to_ptr.vmem [resolvable:$true] %s35
      %38 = dma.hbm_to_vmem [thread:$0]  %s0, 128, %s36, [#allocation6]
    $region5: #{node2vec_classifier_forward.1} parent=1 // pred_fallthru
      _
    // Predicated region
    $region6: #{node2vec_classifier_forward.1} parent=1 // pred_check
      _
    $region7: #{node2vec_classifier_forward.1} parent=1 // pred_check_branch
      %40 = sbr.rel (0) target = $region9
    $region8: #{node2vec_classifier_forward.1} parent=1 // pred_region
      %s42 = ssub.s32 128, 128
      %43 = vsyncadd [#allocation8], %s42
      %s45 = sshll.u32 [#allocation7], 4
      %s46 = int_to_ptr.vmem [resolvable:$true] %s45
      %48 = dma.hbm_to_vmem [thread:$0]  %s1, 128, %s46, [#allocation8]
    $region9: #{node2vec_classifier_forward.1} parent=1 // pred_fallthru
      _
    // Predicated region
    $region10: #{node2vec_classifier_forward.1} parent=1 // pred_check
      _
    $region11: #{node2vec_classifier_forward.1} parent=1 // pred_check_branch
      %50 = sbr.rel (0) target = $region13
    $region12: #{node2vec_classifier_forward.1} parent=1 // pred_region
      %s52 = ssub.s32 2048, 2048
      %53 = vsyncadd [#allocation8], %s52
      %s54 = sshll.u32 [#allocation9], 4
      %s55 = int_to_ptr.vmem [resolvable:$true] %s54
      %60 = dma.hbm_to_vmem [thread:$0]  %s2, 2048, %s55, [#allocation8], 128, 128, 8
    $region13: #{node2vec_classifier_forward.1} parent=1 // pred_fallthru
      _
    // Predicated region
    $region14: #{node2vec_classifier_forward.1} parent=1 // pred_check
      _
    $region15: #{node2vec_classifier_forward.1} parent=1 // pred_check_branch
      %62 = sbr.rel (0) target = $region17
    $region16: #{node2vec_classifier_forward.1} parent=1 // pred_region
      %s64 = ssub.s32 32, 32
      %65 = vsyncadd [#allocation11], %s64
      %s67 = sshll.u32 [#allocation10], 4
      %s68 = int_to_ptr.vmem [resolvable:$true] %s67
      %70 = dma.hbm_to_vmem [thread:$0]  %s3, 32, %s68, [#allocation11]
    $region17: #{node2vec_classifier_forward.1} parent=1 // pred_fallthru
      _
    // Predicated region
    $region18: #{node2vec_classifier_forward.1} parent=1 // pred_check
      _
    $region19: #{node2vec_classifier_forward.1} parent=1 // pred_check_branch
      %72 = sbr.rel (0) target = $region21
    $region20: #{node2vec_classifier_forward.1} parent=1 // pred_region
      %s74 = ssub.s32 32, 32
      %75 = vsyncadd [#allocation11], %s74
      %s77 = sshll.u32 [#allocation12], 4
      %s78 = int_to_ptr.vmem [resolvable:$true] %s77
      %80 = dma.hbm_to_vmem [thread:$0]  %s4, 32, %s78, [#allocation11]
    $region21: #{node2vec_classifier_forward.1} parent=1 // pred_fallthru
      _
    // Predicated region
    $region22: #{node2vec_classifier_forward.1} parent=1 // pred_check
      _
    $region23: #{node2vec_classifier_forward.1} parent=1 // pred_check_branch
      %82 = sbr.rel (0) target = $region25
    $region24: #{node2vec_classifier_forward.1} parent=1 // pred_region
      %s84 = ssub.s32 32, 32
      %85 = vsyncadd [#allocation14], %s84
      %s87 = sshll.u32 [#allocation13], 4
      %s88 = int_to_ptr.vmem [resolvable:$true] %s87
      %90 = dma.hbm_to_vmem [thread:$0]  %s5, 32, %s88, [#allocation14]
    $region25: #{node2vec_classifier_forward.1} parent=1 // pred_fallthru
      _
    // Predicated region
    $region26: #{node2vec_classifier_forward.1} parent=1 // pred_check
      _
    $region27: #{node2vec_classifier_forward.1} parent=1 // pred_check_branch
      %92 = sbr.rel (0) target = $region29
    $region28: #{node2vec_classifier_forward.1} parent=1 // pred_region
      %s94 = ssub.s32 1024, 1024
      %95 = vsyncadd [#allocation14], %s94
      %s96 = sshll.u32 [#allocation15], 4
      %s97 = int_to_ptr.vmem [resolvable:$true] %s96
      %102 = dma.hbm_to_vmem [thread:$0]  %s7, 1024, %s97, [#allocation14], 256, 256, 16
    $region29: #{node2vec_classifier_forward.1} parent=1 // pred_fallthru
      _
    // Predicated region
    $region30: #{node2vec_classifier_forward.1} parent=1 // pred_check
      _
    $region31: #{node2vec_classifier_forward.1} parent=1 // pred_check_branch
      %104 = sbr.rel (0) target = $region33
    $region32: #{node2vec_classifier_forward.1} parent=1 // pred_region
      %s106 = ssub.s32 1024, 1024
      %107 = vsyncadd [#allocation17], %s106
      %s108 = sshll.u32 [#allocation16], 4
      %s109 = int_to_ptr.vmem [resolvable:$true] %s108
      %114 = dma.hbm_to_vmem [thread:$0]  %s8, 1024, %s109, [#allocation17], 256, 256, 16
    $region33: #{node2vec_classifier_forward.1} parent=1 // pred_fallthru
      _
    // Predicated region
    $region34: #{node2vec_classifier_forward.1} parent=1 // pred_check
      _
    $region35: #{node2vec_classifier_forward.1} parent=1 // pred_check_branch
      %116 = sbr.rel (0) target = $region37
    $region36: #{node2vec_classifier_forward.1} parent=1 // pred_region
      %s118 = ssub.s32 1024, 1024
      %119 = vsyncadd [#allocation17], %s118
      %s120 = sshll.u32 [#allocation18], 4
      %s121 = int_to_ptr.vmem [resolvable:$true] %s120
      %126 = dma.hbm_to_vmem [thread:$0]  %s9, 1024, %s121, [#allocation17], 256, 256, 16
    $region37: #{node2vec_classifier_forward.1} parent=1 // pred_fallthru
      _
    // Predicated region
    $region38: #{node2vec_classifier_forward.1} parent=1 // pred_check
      _
    $region39: #{node2vec_classifier_forward.1} parent=1 // pred_check_branch
      %128 = sbr.rel (0) target = $region41
    $region40: #{node2vec_classifier_forward.1} parent=1 // pred_region
      %s130 = ssub.s32 2048, 2048
      %131 = vsyncadd [#allocation20], %s130
      %s132 = sshll.u32 [#allocation19], 4
      %s133 = int_to_ptr.vmem [resolvable:$true] %s132
      %138 = dma.hbm_to_vmem [thread:$0]  %s10, 2048, %s133, [#allocation20], 64, 64, 4
    $region41: #{node2vec_classifier_forward.1} parent=1 // pred_fallthru
      _
    // Predicated region
    $region42: #{node2vec_classifier_forward.1} parent=1 // pred_check
      _
    $region43: #{node2vec_classifier_forward.1} parent=1 // pred_check_branch
      %140 = sbr.rel (0) target = $region45
    $region44: #{node2vec_classifier_forward.1} parent=1 // pred_region
      %s142 = ssub.s32 16, 16
      %143 = vsyncadd [#allocation20], %s142
      %s145 = sshll.u32 [#allocation21], 4
      %s146 = int_to_ptr.vmem [resolvable:$true] %s145
      %148 = dma.hbm_to_vmem [thread:$0]  %s11, 16, %s146, [#allocation20]
    $region45: #{node2vec_classifier_forward.1} parent=1 // pred_fallthru
      _
    // Predicated region
    $region46: #{node2vec_classifier_forward.1} parent=1 // pred_check
      _
    $region47: #{node2vec_classifier_forward.1} parent=1 // pred_check_branch
      %150 = sbr.rel (0) target = $region49
    $region48: #{node2vec_classifier_forward.1} parent=1 // pred_region
      %s152 = ssub.s32 16, 16
      %153 = vsyncadd [#allocation23], %s152
      %s155 = sshll.u32 [#allocation22], 4
      %s156 = int_to_ptr.vmem [resolvable:$true] %s155
      %158 = dma.hbm_to_vmem [thread:$0]  %s12, 16, %s156, [#allocation23]
    $region49: #{node2vec_classifier_forward.1} parent=1 // pred_fallthru
      _
    // Predicated region
    $region50: #{node2vec_classifier_forward.1} parent=1 // pred_check
      _
    $region51: #{node2vec_classifier_forward.1} parent=1 // pred_check_branch
      %160 = sbr.rel (0) target = $region53
    $region52: #{node2vec_classifier_forward.1} parent=1 // pred_region
      %s162 = ssub.s32 16, 16
      %163 = vsyncadd [#allocation23], %s162
      %s165 = sshll.u32 [#allocation24], 4
      %s166 = int_to_ptr.vmem [resolvable:$true] %s165
      %168 = dma.hbm_to_vmem [thread:$0]  %s13, 16, %s166, [#allocation23]
    $region53: #{node2vec_classifier_forward.1} parent=1 // pred_fallthru
      _
    // Predicated region
    $region54: #{node2vec_classifier_forward.1} parent=1 // pred_check
      _
    $region55: #{node2vec_classifier_forward.1} parent=1 // pred_check_branch
      %170 = sbr.rel (0) target = $region57
    $region56: #{node2vec_classifier_forward.1} parent=1 // pred_region
      %s172 = ssub.s32 1024, 1024
      %173 = vsyncadd [#allocation26], %s172
      %s174 = sshll.u32 [#allocation25], 4
      %s175 = int_to_ptr.vmem [resolvable:$true] %s174
      %180 = dma.hbm_to_vmem [thread:$0]  %s14, 1024, %s175, [#allocation26], 64, 64, 4
    $region57: #{node2vec_classifier_forward.1} parent=1 // pred_fallthru
      _
    // Predicated region
    $region58: #{node2vec_classifier_forward.1} parent=1 // pred_check
      _
    $region59: #{node2vec_classifier_forward.1} parent=1 // pred_check_branch
      %182 = sbr.rel (0) target = $region61
    $region60: #{node2vec_classifier_forward.1} parent=1 // pred_region
      %s184 = ssub.s32 16, 16
      %185 = vsyncadd [#allocation26], %s184
      %s187 = sshll.u32 [#allocation27], 4
      %s188 = int_to_ptr.vmem [resolvable:$true] %s187
      %190 = dma.hbm_to_vmem [thread:$0]  %s15, 16, %s188, [#allocation26]
    $region61: #{node2vec_classifier_forward.1} parent=1 // pred_fallthru
      _
    // Predicated region
    $region62: #{node2vec_classifier_forward.1} parent=1 // pred_check
      _
    $region63: #{node2vec_classifier_forward.1} parent=1 // pred_check_branch
      %192 = sbr.rel (0) target = $region65
    $region64: #{node2vec_classifier_forward.1} parent=1 // pred_region
      %193 = dma.done [#allocation6], 128
    $region65: #{node2vec_classifier_forward.1} parent=1 // pred_fallthru
      _
    // Predicated region
    $region66: #{node2vec_classifier_forward.1} parent=1 // pred_check
      _
    $region67: #{node2vec_classifier_forward.1} parent=1 // pred_check_branch
      %195 = sbr.rel (0) target = $region69
    $region68: #{node2vec_classifier_forward.1} parent=1 // pred_region
      %196 = dma.done [#allocation8], 128
    $region69: #{node2vec_classifier_forward.1} parent=1 // pred_fallthru
      _
    // Predicated region
    $region70: #{node2vec_classifier_forward.1} parent=1 // pred_check
      _
    $region71: #{node2vec_classifier_forward.1} parent=1 // pred_check_branch
      %198 = sbr.rel (0) target = $region73
    $region72: #{node2vec_classifier_forward.1} parent=1 // pred_region
      %199 = dma.done [#allocation8], 2048
    $region73: #{node2vec_classifier_forward.1} parent=1 // pred_fallthru
      _
    // Predicated region
    $region74: #{node2vec_classifier_forward.1} parent=1 // pred_check
      _
    $region75: #{node2vec_classifier_forward.1} parent=1 // pred_check_branch
      %201 = sbr.rel (0) target = $region77
    $region76: #{node2vec_classifier_forward.1} parent=1 // pred_region
      %202 = dma.done [#allocation11], 32
    $region77: #{node2vec_classifier_forward.1} parent=1 // pred_fallthru
      _
    // Predicated region
    $region78: #{node2vec_classifier_forward.1} parent=1 // pred_check
      _
    $region79: #{node2vec_classifier_forward.1} parent=1 // pred_check_branch
      %204 = sbr.rel (0) target = $region81
    $region80: #{node2vec_classifier_forward.1} parent=1 // pred_region
      %205 = dma.done [#allocation11], 32
    $region81: #{node2vec_classifier_forward.1} parent=1 // pred_fallthru
      _
    // Predicated region
    $region82: #{node2vec_classifier_forward.1} parent=1 // pred_check
      _
    $region83: #{node2vec_classifier_forward.1} parent=1 // pred_check_branch
      %207 = sbr.rel (0) target = $region85
    $region84: #{node2vec_classifier_forward.1} parent=1 // pred_region
      %208 = dma.done [#allocation14], 32
    $region85: #{node2vec_classifier_forward.1} parent=1 // pred_fallthru
      _
    // Predicated region
    $region86: #{node2vec_classifier_forward.1} parent=1 // pred_check
      _
    $region87: #{node2vec_classifier_forward.1} parent=1 // pred_check_branch
      %210 = sbr.rel (0) target = $region89
    $region88: #{node2vec_classifier_forward.1} parent=1 // pred_region
      %211 = dma.done [#allocation14], 1024
    $region89: #{node2vec_classifier_forward.1} parent=1 // pred_fallthru
      _
    // Predicated region
    $region90: #{node2vec_classifier_forward.1} parent=1 // pred_check
      _
    $region91: #{node2vec_classifier_forward.1} parent=1 // pred_check_branch
      %213 = sbr.rel (0) target = $region93
    $region92: #{node2vec_classifier_forward.1} parent=1 // pred_region
      %214 = dma.done [#allocation17], 1024
    $region93: #{node2vec_classifier_forward.1} parent=1 // pred_fallthru
      _
    // Predicated region
    $region94: #{node2vec_classifier_forward.1} parent=1 // pred_check
      _
    $region95: #{node2vec_classifier_forward.1} parent=1 // pred_check_branch
      %216 = sbr.rel (0) target = $region97
    $region96: #{node2vec_classifier_forward.1} parent=1 // pred_region
      %217 = dma.done [#allocation17], 1024
    $region97: #{node2vec_classifier_forward.1} parent=1 // pred_fallthru
      _
    // Predicated region
    $region98: #{node2vec_classifier_forward.1} parent=1 // pred_check
      _
    $region99: #{node2vec_classifier_forward.1} parent=1 // pred_check_branch
      %219 = sbr.rel (0) target = $region101
    $region100: #{node2vec_classifier_forward.1} parent=1 // pred_region
      %220 = dma.done [#allocation20], 2048
    $region101: #{node2vec_classifier_forward.1} parent=1 // pred_fallthru
      _
    // Predicated region
    $region102: #{node2vec_classifier_forward.1} parent=1 // pred_check
      _
    $region103: #{node2vec_classifier_forward.1} parent=1 // pred_check_branch
      %222 = sbr.rel (0) target = $region105
    $region104: #{node2vec_classifier_forward.1} parent=1 // pred_region
      %223 = dma.done [#allocation20], 16
    $region105: #{node2vec_classifier_forward.1} parent=1 // pred_fallthru
      _
    // Predicated region
    $region106: #{node2vec_classifier_forward.1} parent=1 // pred_check
      _
    $region107: #{node2vec_classifier_forward.1} parent=1 // pred_check_branch
      %225 = sbr.rel (0) target = $region109
    $region108: #{node2vec_classifier_forward.1} parent=1 // pred_region
      %226 = dma.done [#allocation23], 16
    $region109: #{node2vec_classifier_forward.1} parent=1 // pred_fallthru
      _
    // Predicated region
    $region110: #{node2vec_classifier_forward.1} parent=1 // pred_check
      _
    $region111: #{node2vec_classifier_forward.1} parent=1 // pred_check_branch
      %228 = sbr.rel (0) target = $region113
    $region112: #{node2vec_classifier_forward.1} parent=1 // pred_region
      %229 = dma.done [#allocation23], 16
    $region113: #{node2vec_classifier_forward.1} parent=1 // pred_fallthru
      _
    // Predicated region
    $region114: #{node2vec_classifier_forward.1} parent=1 // pred_check
      _
    $region115: #{node2vec_classifier_forward.1} parent=1 // pred_check_branch
      %231 = sbr.rel (0) target = $region117
    $region116: #{node2vec_classifier_forward.1} parent=1 // pred_region
      %232 = dma.done [#allocation26], 1024
    $region117: #{node2vec_classifier_forward.1} parent=1 // pred_fallthru
      _
    // Predicated region
    $region118: #{node2vec_classifier_forward.1} parent=1 // pred_check
      _
    $region119: #{node2vec_classifier_forward.1} parent=1 // pred_check_branch
      %234 = sbr.rel (0) target = $region121
    $region120: #{node2vec_classifier_forward.1} parent=1 // pred_region
      %235 = dma.done [#allocation26], 16
    $region121: #{node2vec_classifier_forward.1} parent=1 // pred_fallthru
      _
    %s238 = sshll.u32 1, 14
    %s239 = sxor.u32 4294967295, %s238
    %s241 = sld [smem:[#allocation0]]
    %s242 = sadd.s32 2, %s241
    %s244 = sshll.u32 7, 26
    %s245 = sxor.u32 4294967295, %s244
    %s246 = sand.u32 0, %s245
    %s247 = sshll.u32 %s242, 26
    %s248 = sor.u32 %s246, %s247
    %s249 = sshll.u32 [#allocation2], 4
    %s250 = int_to_ptr.vmem [resolvable:$true] %s249
    %253 = sst [smem:[#allocation29]] 256
    %s254 = scalar_lea.smem [#allocation29], 1
    %255 = sst [smem:[%s254]] 256
    %s256 = scalar_lea.smem [#allocation29], 2
    %257 = sst [smem:[%s256]] 2
    %s258 = scalar_lea.smem [#allocation29], 3
    %259 = sst [smem:[%s258]] 64
    %s260 = scalar_lea.smem [#allocation29], 4
    %261 = sst [smem:[%s260]] 128
    %s262 = scalar_lea.smem [#allocation29], 5
    %263 = sst [smem:[%s262]] 2
    %s264 = scalar_lea.smem [#allocation29], 6
    %265 = sst [smem:[%s264]] 128
    %s266 = scalar_lea.smem [#allocation29], 7
    %267 = sst [smem:[%s266]] 64
    %s268 = scalar_lea.smem [#allocation29], 8
    %269 = sst [smem:[%s268]] 4
    %271 = dma.general %s6, 4096, %s250, [#allocation3], [#allocation28], [#allocation29], %s248, 0
    %v272 = vld [vmem:[#allocation5] sm:$0xff]
    %v273 = vld [vmem:[#allocation7] sm:$0xff]
    %v274 = vmul.f32 %v272, %v273
    %v275 = vpack.c.bf16 %v274, %v274
    %v276 = vld [vmem:[#allocation9] sm:$0xff]
    %v277 = vld [vmem:[#allocation9 + $0x8] sm:$0xff]
    %v278 = vld [vmem:[#allocation9 + $0x10] sm:$0xff]
    %v279 = vld [vmem:[#allocation9 + $0x18] sm:$0xff]
    %v280 = vld [vmem:[#allocation9 + $0x20] sm:$0xff]
    %v281 = vld [vmem:[#allocation9 + $0x28] sm:$0xff]
    %v282 = vld [vmem:[#allocation9 + $0x30] sm:$0xff]
    %v283 = vld [vmem:[#allocation9 + $0x38] sm:$0xff]
    %v284 = vld [vmem:[#allocation9 + $0x40] sm:$0xff]
    %v285 = vld [vmem:[#allocation9 + $0x48] sm:$0xff]
    %v286 = vld [vmem:[#allocation9 + $0x50] sm:$0xff]
    %v287 = vld [vmem:[#allocation9 + $0x58] sm:$0xff]
    %v288 = vld [vmem:[#allocation9 + $0x60] sm:$0xff]
    %v289 = vld [vmem:[#allocation9 + $0x68] sm:$0xff]
    %v290 = vld [vmem:[#allocation9 + $0x70] sm:$0xff]
    %v291 = vld [vmem:[#allocation9 + $0x78] sm:$0xff]
    %v292 = vld [vmem:[#allocation10] sm:$0x3]
    %v294 = vlaneseq
    %v295 = vshrl.u32 %v294, 7
    %v296 = vsub.s32 0, %v295
    %v297 = vrot.slane %v292, %v296
    %v298 = vlaneseq
    %v299 = vshrl.u32 %v298, 7
    %v300 = vsub.s32 1, %v299
    %v301 = vrot.slane %v292, %v300
    %v320 = vunpack.c.l.b16 %v276
    %v321 = vunpack.c.h.b16 %v276
    %v322 = vunpack.c.l.b16 %v277
    %v323 = vunpack.c.h.b16 %v277
    %v324 = vunpack.c.l.b16 %v278
    %v325 = vunpack.c.h.b16 %v278
    %v326 = vunpack.c.l.b16 %v279
    %v327 = vunpack.c.h.b16 %v279
    %v328 = vunpack.c.l.b16 %v280
    %v329 = vunpack.c.h.b16 %v280
    %v330 = vunpack.c.l.b16 %v281
    %v331 = vunpack.c.h.b16 %v281
    %v332 = vunpack.c.l.b16 %v282
    %v333 = vunpack.c.h.b16 %v282
    %v334 = vunpack.c.l.b16 %v283
    %v335 = vunpack.c.h.b16 %v283
    %v336 = vunpack.c.l.b16 %v284
    %v337 = vunpack.c.h.b16 %v284
    %v338 = vunpack.c.l.b16 %v285
    %v339 = vunpack.c.h.b16 %v285
    %v340 = vunpack.c.l.b16 %v286
    %v341 = vunpack.c.h.b16 %v286
    %v342 = vunpack.c.l.b16 %v287
    %v343 = vunpack.c.h.b16 %v287
    %v344 = vunpack.c.l.b16 %v288
    %v345 = vunpack.c.h.b16 %v288
    %v346 = vunpack.c.l.b16 %v289
    %v347 = vunpack.c.h.b16 %v289
    %v348 = vunpack.c.l.b16 %v290
    %v349 = vunpack.c.h.b16 %v290
    %v350 = vunpack.c.l.b16 %v291
    %v351 = vunpack.c.h.b16 %v291
    %v352 = vpack.c.b16 %v322, %v320
    %v353 = vpack.c.b16 %v323, %v321
    %v354 = vpack.c.b16 %v326, %v324
    %v355 = vpack.c.b16 %v327, %v325
    %v356 = vpack.c.b16 %v330, %v328
    %v357 = vpack.c.b16 %v331, %v329
    %v358 = vpack.c.b16 %v334, %v332
    %v359 = vpack.c.b16 %v335, %v333
    %v360 = vpack.c.b16 %v338, %v336
    %v361 = vpack.c.b16 %v339, %v337
    %v362 = vpack.c.b16 %v342, %v340
    %v363 = vpack.c.b16 %v343, %v341
    %v364 = vpack.c.b16 %v346, %v344
    %v365 = vpack.c.b16 %v347, %v345
    %v366 = vpack.c.b16 %v350, %v348
    %v367 = vpack.c.b16 %v351, %v349
    %384 = vmatprep.subr.bf16.mxu0 %v353
    %385 = vmatpush1.bf16.msra.mxu0 %v352
    %386 = vmatprep.subr.bf16.mxu0 %v355
    %387 = vmatpush1.bf16.msra.mxu0 %v354
    %388 = vmatprep.subr.bf16.mxu0 %v357
    %389 = vmatpush1.bf16.msra.mxu0 %v356
    %390 = vmatprep.subr.bf16.mxu0 %v359
    %391 = vmatpush1.bf16.msra.mxu0 %v358
    %392 = vmatprep.subr.bf16.mxu0 %v361
    %393 = vmatpush1.bf16.msra.mxu0 %v360
    %394 = vmatprep.subr.bf16.mxu0 %v363
    %395 = vmatpush1.bf16.msra.mxu0 %v362
    %396 = vmatprep.subr.bf16.mxu0 %v365
    %397 = vmatpush1.bf16.msra.mxu0 %v364
    %398 = vmatprep.subr.bf16.mxu0 %v367
    %399 = vmatpush1.bf16.msra.mxu0 %v366
    %400 = vmatprep.subr.bf16.mxu0 0
    %401 = vmatpush1.bf16.msra.mxu0 0
    %402 = vmatprep.subr.bf16.mxu0 0
    %403 = vmatpush1.bf16.msra.mxu0 0
    %404 = vmatprep.subr.bf16.mxu0 0
    %405 = vmatpush1.bf16.msra.mxu0 0
    %406 = vmatprep.subr.bf16.mxu0 0
    %407 = vmatpush1.bf16.msra.mxu0 0
    %408 = vmatprep.subr.bf16.mxu0 0
    %409 = vmatpush1.bf16.msra.mxu0 0
    %410 = vmatprep.subr.bf16.mxu0 0
    %411 = vmatpush1.bf16.msra.mxu0 0
    %412 = vmatprep.subr.bf16.mxu0 0
    %413 = vmatpush1.bf16.msra.mxu0 0
    %414 = vmatprep.subr.bf16.mxu0 0
    %415 = vmatpush1.bf16.msra.mxu0 0
    %416 = vmatprep.mubr.bf16.mxu0 0
    %417 = vmatmul.mubr.bf16.gmra.mrb[0].mxu0 %v275
    %v418 = vpop.f32.mrb[0].mxu0
    %v419 = vadd.f32 %v297, %v418
    %v420 = vpop.f32.mrb[0].mxu0
    %v421 = vadd.f32 %v301, %v420
    %v422 = vpop.f32.mrb[0].mxu0
    %v423 = vpop.f32.mrb[0].mxu0
    %424 = vdwg.mxu0
    %v425 = vld [vmem:[#allocation12] sm:$0x3]
    %v426 = vld [vmem:[#allocation13] sm:$0x3]
    %v427 = vadd.f32 %v419, %v421
    %428 = vadd.xlane.f32.xlu0 %v427
    %v429 = vpop.xlane.xlu0 %428
    %v430 = vrcp.pop 256.0
    %v431 = vmul.f32 %v429, %v430
    %v432 = vsub.f32 %v419, %v431
    %v433 = vsub.f32 %v421, %v431
    %v434 = vmul.f32 %v432, %v432
    %v435 = vmul.f32 %v433, %v433
    %v436 = vadd.f32 %v434, %v435
    %437 = vadd.xlane.f32.xlu0 %v436
    %v438 = vpop.xlane.xlu0 %437
    %v439 = vmul.f32 %v438, %v430
    %v440 = vadd.f32 %v439, 1e-05
    %v441 = vrsqrt.pop %v440
    %v442 = vmul.f32 %v432, %v441
    %v443 = vmul.f32 %v433, %v441
    %v445 = vlaneseq
    %v446 = vshrl.u32 %v445, 7
    %v447 = vsub.s32 0, %v446
    %v448 = vrot.slane %v425, %v447
    %v449 = vlaneseq
    %v450 = vshrl.u32 %v449, 7
    %v451 = vsub.s32 1, %v450
    %v452 = vrot.slane %v425, %v451
    %v455 = vmul.f32 %v442, %v448
    %v456 = vmul.f32 %v443, %v452
    %v458 = vlaneseq
    %v459 = vshrl.u32 %v458, 7
    %v460 = vsub.s32 0, %v459
    %v461 = vrot.slane %v426, %v460
    %v462 = vlaneseq
    %v463 = vshrl.u32 %v462, 7
    %v464 = vsub.s32 1, %v463
    %v465 = vrot.slane %v426, %v464
    %v468 = vadd.f32 %v455, %v461
    %v469 = vadd.f32 %v456, %v465
    %v470 = vmax.f32 %v468, 0.0
    %v471 = vmax.f32 %v469, 0.0
    %472 = vst [vmem:[#allocation4] sm:$0xff] %v470
    %473 = vst [vmem:[#allocation4 + $0x8] sm:$0xff] %v471
    loop: start=0, step=1, limit=25
    $region122: #{node2vec_classifier_forward.1} parent=1 // loop_pre_header
      _
    $region123: #{node2vec_classifier_forward.1} parent=1 // loop_header
      %s475 = sphi 0, %s479
      %p476 = scmp.ge.s32.totalorder %s475, 25
    $region124: #{node2vec_classifier_forward.1} parent=1 // loop_header_branch
      %478 = sbr.rel (%p476) target = $region128
    $region125: #{node2vec_classifier_forward.1} parent=1 // loop_body
      %p480 = scmp.lt.s32.totalorder %s475, 0
      %s481 = ssub.s32 0, %s475
      %s482 = scalar_select %p480, %s481, %s475
      %s483 = sand.u32 %s482, 1
      %s484 = ssub.s32 0, %s483
      %s485 = scalar_select %p480, %s484, %s483
      %p486 = scmp.ne.s32.totalorder %s485, 0
      %p487 = scmp.lt.s32.totalorder %s485, 0
      %p488 = pnand %p487, %p486
      %p489 = pneg %p488
      %s490 = sadd.s32 %s485, 2
      %s491 = scalar_select %p489, %s490, %s485
      %s492 = smul.u32 %s491, 32
      %s493 = smul.addr %s492, 8
      %s494 = scalar_lea.vmem [#allocation2], %s493
      %s495 = scalar_lea.sflag [#allocation3], %s491
      %s496 = smul.u32 4, 32
      %s497 = smul.u32 %s496, 2
      %s498 = sshll.u32 %s497, 4
      %499 = dma.done %s495, %s498
      %s500 = sadd.s32 %s475, 1
      %p501 = scmp.lt.s32.totalorder %s500, 25
      // Predicated region
      $region129: #{node2vec_classifier_forward.1} parent=125 // pred_check
        %p502 = pneg %p501
      $region130: #{node2vec_classifier_forward.1} parent=125 // pred_check_branch
        %504 = sbr.rel (%p502) target = $region132
      $region131: #{node2vec_classifier_forward.1} parent=125 // pred_region
        #allocation31 [shape = 'u32[9]{0}', space=smem, size = 0x24, scoped, tag = 'DMA stride descriptor']
        %s505 = ssub.s32 1, %s491
        %s506 = smul.u32 %s500, 64
        %s507 = smul.addr %s506, 64
        %s508 = scalar_lea.hbm %s6, %s507
        %s509 = smul.u32 %s505, 32
        %s510 = smul.addr %s509, 8
        %s511 = scalar_lea.vmem [#allocation2], %s510
        %s512 = scalar_lea.sflag [#allocation3], %s505
        %s514 = sshll.u32 1, 14
        %s515 = sxor.u32 4294967295, %s514
        %s517 = sld [smem:[#allocation0]]
        %s518 = sadd.s32 2, %s517
        %s520 = sshll.u32 7, 26
        %s521 = sxor.u32 4294967295, %s520
        %s522 = sand.u32 0, %s521
        %s523 = sshll.u32 %s518, 26
        %s524 = sor.u32 %s522, %s523
        %s525 = sshll.u32 %s511, 4
        %s526 = int_to_ptr.vmem [resolvable:$true] %s525
        %529 = sst [smem:[#allocation31]] 256
        %s530 = scalar_lea.smem [#allocation31], 1
        %531 = sst [smem:[%s530]] 256
        %s532 = scalar_lea.smem [#allocation31], 2
        %533 = sst [smem:[%s532]] 2
        %s534 = scalar_lea.smem [#allocation31], 3
        %535 = sst [smem:[%s534]] 64
        %s536 = scalar_lea.smem [#allocation31], 4
        %537 = sst [smem:[%s536]] 128
        %s538 = scalar_lea.smem [#allocation31], 5
        %539 = sst [smem:[%s538]] 2
        %s540 = scalar_lea.smem [#allocation31], 6
        %541 = sst [smem:[%s540]] 128
        %s542 = scalar_lea.smem [#allocation31], 7
        %543 = sst [smem:[%s542]] 64
        %s544 = scalar_lea.smem [#allocation31], 8
        %545 = sst [smem:[%s544]] 4
        %547 = dma.general %s508, 4096, %s526, %s512, [#allocation30], [#allocation31], %s524, 0
      $region132: #{node2vec_classifier_forward.1} parent=125 // pred_fallthru
        _
      %v548 = vld [vmem:[#allocation4] sm:$0xff]
      %v549 = vld [vmem:[#allocation4 + $0x8] sm:$0xff]
      %v550 = vpack.c.bf16 %v548, %v548
      %v551 = vpack.c.bf16 %v549, %v549
      %v552 = vld [vmem:[%s494] sm:$0xff]
      %v553 = vld [vmem:[%s494 + $0x8] sm:$0xff]
      %v554 = vld [vmem:[%s494 + $0x10] sm:$0xff]
      %v555 = vld [vmem:[%s494 + $0x18] sm:$0xff]
      %v556 = vld [vmem:[%s494 + $0x20] sm:$0xff]
      %v557 = vld [vmem:[%s494 + $0x28] sm:$0xff]
      %v558 = vld [vmem:[%s494 + $0x30] sm:$0xff]
      %v559 = vld [vmem:[%s494 + $0x38] sm:$0xff]
      %v560 = vld [vmem:[%s494 + $0x40] sm:$0xff]
      %v561 = vld [vmem:[%s494 + $0x48] sm:$0xff]
      %v562 = vld [vmem:[%s494 + $0x50] sm:$0xff]
      %v563 = vld [vmem:[%s494 + $0x58] sm:$0xff]
      %v564 = vld [vmem:[%s494 + $0x60] sm:$0xff]
      %v565 = vld [vmem:[%s494 + $0x68] sm:$0xff]
      %v566 = vld [vmem:[%s494 + $0x70] sm:$0xff]
      %v567 = vld [vmem:[%s494 + $0x78] sm:$0xff]
      %v568 = vld [vmem:[%s494 + $0x80] sm:$0xff]
      %v569 = vld [vmem:[%s494 + $0x88] sm:$0xff]
      %v570 = vld [vmem:[%s494 + $0x90] sm:$0xff]
      %v571 = vld [vmem:[%s494 + $0x98] sm:$0xff]
      %v572 = vld [vmem:[%s494 + $0xa0] sm:$0xff]
      %v573 = vld [vmem:[%s494 + $0xa8] sm:$0xff]
      %v574 = vld [vmem:[%s494 + $0xb0] sm:$0xff]
      %v575 = vld [vmem:[%s494 + $0xb8] sm:$0xff]
      %v576 = vld [vmem:[%s494 + $0xc0] sm:$0xff]
      %v577 = vld [vmem:[%s494 + $0xc8] sm:$0xff]
      %v578 = vld [vmem:[%s494 + $0xd0] sm:$0xff]
      %v579 = vld [vmem:[%s494 + $0xd8] sm:$0xff]
      %v580 = vld [vmem:[%s494 + $0xe0] sm:$0xff]
      %v581 = vld [vmem:[%s494 + $0xe8] sm:$0xff]
      %v582 = vld [vmem:[%s494 + $0xf0] sm:$0xff]
      %v583 = vld [vmem:[%s494 + $0xf8] sm:$0xff]
      %s584 = sshra.s32 %s475, 3
      %s585 = sand.u32 %s475, 7
      %s586 = sshra.s32 %s475, 3
      %s587 = sand.u32 %s475, 7
      %s588 = smul.u32 %s584, 2
      %s589 = smul.u32 %s588, 8
      %s590 = sadd.s32 %s589, %s587
      %s591 = scalar_lea.vmem [#allocation15], %s590
      %v592 = vld [vmem:[%s591] ss:$8 sm:$0x3]
      %v594 = vlaneseq
      %v595 = vshrl.u32 %v594, 7
      %v596 = vsub.s32 0, %v595
      %v597 = vrot.slane %v592, %v596
      %v598 = vlaneseq
      %v599 = vshrl.u32 %v598, 7
      %v600 = vsub.s32 1, %v599
      %v601 = vrot.slane %v592, %v600
      %604 = vmatprep.subr.bf16.mxu0 %v553
      %605 = vmatpush1.bf16.msra.mxu0 %v552
      %606 = vmatprep.subr.bf16.mxu0 %v555
      %607 = vmatpush1.bf16.msra.mxu0 %v554
      %608 = vmatprep.subr.bf16.mxu0 %v557
      %609 = vmatpush1.bf16.msra.mxu0 %v556
      %610 = vmatprep.subr.bf16.mxu0 %v559
      %611 = vmatpush1.bf16.msra.mxu0 %v558
      %612 = vmatprep.subr.bf16.mxu0 %v561
      %613 = vmatpush1.bf16.msra.mxu0 %v560
      %614 = vmatprep.subr.bf16.mxu0 %v563
      %615 = vmatpush1.bf16.msra.mxu0 %v562
      %616 = vmatprep.subr.bf16.mxu0 %v565
      %617 = vmatpush1.bf16.msra.mxu0 %v564
      %618 = vmatprep.subr.bf16.mxu0 %v567
      %619 = vmatpush1.bf16.msra.mxu0 %v566
      %620 = vmatprep.subr.bf16.mxu0 %v569
      %621 = vmatpush1.bf16.msra.mxu0 %v568
      %622 = vmatprep.subr.bf16.mxu0 %v571
      %623 = vmatpush1.bf16.msra.mxu0 %v570
      %624 = vmatprep.subr.bf16.mxu0 %v573
      %625 = vmatpush1.bf16.msra.mxu0 %v572
      %626 = vmatprep.subr.bf16.mxu0 %v575
      %627 = vmatpush1.bf16.msra.mxu0 %v574
      %628 = vmatprep.subr.bf16.mxu0 %v577
      %629 = vmatpush1.bf16.msra.mxu0 %v576
      %630 = vmatprep.subr.bf16.mxu0 %v579
      %631 = vmatpush1.bf16.msra.mxu0 %v578
      %632 = vmatprep.subr.bf16.mxu0 %v581
      %633 = vmatpush1.bf16.msra.mxu0 %v580
      %634 = vmatprep.subr.bf16.mxu0 %v583
      %635 = vmatpush1.bf16.msra.mxu0 %v582
      %636 = vmatprep.mubr.bf16.mxu0 %v551
      %637 = vmatmul.mubr.bf16.gmra.mrb[0].mxu0 %v550
      %v638 = vpop.f32.mrb[0].mxu0
      %v639 = vadd.f32 %v597, %v638
      %v640 = vpop.f32.mrb[0].mxu0
      %v641 = vadd.f32 %v601, %v640
      %v642 = vpop.f32.mrb[0].mxu0
      %v643 = vpop.f32.mrb[0].mxu0
      %644 = vdwg.mxu0
      %s645 = scalar_lea.vmem [#allocation16], %s590
      %v646 = vld [vmem:[%s645] ss:$8 sm:$0x3]
      %s647 = scalar_lea.vmem [#allocation18], %s590
      %v648 = vld [vmem:[%s647] ss:$8 sm:$0x3]
      %v649 = vadd.f32 %v639, %v641
      %650 = vadd.xlane.f32.xlu0 %v649
      %v651 = vpop.xlane.xlu0 %650
      %v652 = vmul.f32 %v651, %v430
      %v653 = vsub.f32 %v639, %v652
      %v654 = vsub.f32 %v641, %v652
      %v655 = vmul.f32 %v653, %v653
      %v656 = vmul.f32 %v654, %v654
      %v657 = vadd.f32 %v655, %v656
      %658 = vadd.xlane.f32.xlu0 %v657
      %v659 = vpop.xlane.xlu0 %658
      %v660 = vmul.f32 %v659, %v430
      %v661 = vadd.f32 %v660, 1e-05
      %v662 = vrsqrt.pop %v661
      %v663 = vmul.f32 %v653, %v662
      %v664 = vmul.f32 %v654, %v662
      %v666 = vlaneseq
      %v667 = vshrl.u32 %v666, 7
      %v668 = vsub.s32 0, %v667
      %v669 = vrot.slane %v646, %v668
      %v670 = vlaneseq
      %v671 = vshrl.u32 %v670, 7
      %v672 = vsub.s32 1, %v671
      %v673 = vrot.slane %v646, %v672
      %v676 = vmul.f32 %v663, %v669
      %v677 = vmul.f32 %v664, %v673
      %v679 = vlaneseq
      %v680 = vshrl.u32 %v679, 7
      %v681 = vsub.s32 0, %v680
      %v682 = vrot.slane %v648, %v681
      %v683 = vlaneseq
      %v684 = vshrl.u32 %v683, 7
      %v685 = vsub.s32 1, %v684
      %v686 = vrot.slane %v648, %v685
      %v689 = vadd.f32 %v676, %v682
      %v690 = vadd.f32 %v677, %v686
      %v691 = vmax.f32 %v689, 0.0
      %v692 = vmax.f32 %v690, 0.0
      %693 = vst [vmem:[#allocation4] sm:$0xff] %v691
      %694 = vst [vmem:[#allocation4 + $0x8] sm:$0xff] %v692
    $region126: #{node2vec_classifier_forward.1} parent=1 // loop_footer
      %s479 = sadd.s32 1, %s475
    $region127: #{node2vec_classifier_forward.1} parent=1 // loop_footer_branch
      %474 = sbr.rel target = $region123
    $region128: #{node2vec_classifier_forward.1} parent=1 // loop_exit
      _
    %v695 = vld [vmem:[#allocation4] sm:$0xff]
    %v696 = vld [vmem:[#allocation4 + $0x8] sm:$0xff]
    %v697 = vpack.c.bf16 %v695, %v695
    %v698 = vpack.c.bf16 %v696, %v696
    %v699 = vld [vmem:[#allocation19] sm:$0xf]
    %v700 = vld [vmem:[#allocation19 + $0x4] sm:$0xf]
    %v701 = vld [vmem:[#allocation19 + $0x8] sm:$0xf]
    %v702 = vld [vmem:[#allocation19 + $0xc] sm:$0xf]
    %v703 = vld [vmem:[#allocation19 + $0x10] sm:$0xf]
    %v704 = vld [vmem:[#allocation19 + $0x14] sm:$0xf]
    %v705 = vld [vmem:[#allocation19 + $0x18] sm:$0xf]
    %v706 = vld [vmem:[#allocation19 + $0x1c] sm:$0xf]
    %v707 = vld [vmem:[#allocation19 + $0x20] sm:$0xf]
    %v708 = vld [vmem:[#allocation19 + $0x24] sm:$0xf]
    %v709 = vld [vmem:[#allocation19 + $0x28] sm:$0xf]
    %v710 = vld [vmem:[#allocation19 + $0x2c] sm:$0xf]
    %v711 = vld [vmem:[#allocation19 + $0x30] sm:$0xf]
    %v712 = vld [vmem:[#allocation19 + $0x34] sm:$0xf]
    %v713 = vld [vmem:[#allocation19 + $0x38] sm:$0xf]
    %v714 = vld [vmem:[#allocation19 + $0x3c] sm:$0xf]
    %v715 = vld [vmem:[#allocation19 + $0x40] sm:$0xf]
    %v716 = vld [vmem:[#allocation19 + $0x44] sm:$0xf]
    %v717 = vld [vmem:[#allocation19 + $0x48] sm:$0xf]
    %v718 = vld [vmem:[#allocation19 + $0x4c] sm:$0xf]
    %v719 = vld [vmem:[#allocation19 + $0x50] sm:$0xf]
    %v720 = vld [vmem:[#allocation19 + $0x54] sm:$0xf]
    %v721 = vld [vmem:[#allocation19 + $0x58] sm:$0xf]
    %v722 = vld [vmem:[#allocation19 + $0x5c] sm:$0xf]
    %v723 = vld [vmem:[#allocation19 + $0x60] sm:$0xf]
    %v724 = vld [vmem:[#allocation19 + $0x64] sm:$0xf]
    %v725 = vld [vmem:[#allocation19 + $0x68] sm:$0xf]
    %v726 = vld [vmem:[#allocation19 + $0x6c] sm:$0xf]
    %v727 = vld [vmem:[#allocation19 + $0x70] sm:$0xf]
    %v728 = vld [vmem:[#allocation19 + $0x74] sm:$0xf]
    %v729 = vld [vmem:[#allocation19 + $0x78] sm:$0xf]
    %v730 = vld [vmem:[#allocation19 + $0x7c] sm:$0xf]
    %v731 = vld [vmem:[#allocation21] sm:$0x1]
    %v733 = vlaneseq
    %v734 = vshrl.u32 %v733, 7
    %v735 = vsub.s32 0, %v734
    %v736 = vrot.slane %v731, %v735
    %v770 = vunpack.c.l.b16 %v699
    %v771 = vunpack.c.l.b16 %v700
    %v772 = vunpack.c.l.b16 %v701
    %v773 = vunpack.c.l.b16 %v702
    %v774 = vunpack.c.l.b16 %v703
    %v775 = vunpack.c.l.b16 %v704
    %v776 = vunpack.c.l.b16 %v705
    %v777 = vunpack.c.l.b16 %v706
    %v778 = vunpack.c.l.b16 %v707
    %v779 = vunpack.c.l.b16 %v708
    %v780 = vunpack.c.l.b16 %v709
    %v781 = vunpack.c.l.b16 %v710
    %v782 = vunpack.c.l.b16 %v711
    %v783 = vunpack.c.l.b16 %v712
    %v784 = vunpack.c.l.b16 %v713
    %v785 = vunpack.c.l.b16 %v714
    %v786 = vunpack.c.l.b16 %v715
    %v787 = vunpack.c.l.b16 %v716
    %v788 = vunpack.c.l.b16 %v717
    %v789 = vunpack.c.l.b16 %v718
    %v790 = vunpack.c.l.b16 %v719
    %v791 = vunpack.c.l.b16 %v720
    %v792 = vunpack.c.l.b16 %v721
    %v793 = vunpack.c.l.b16 %v722
    %v794 = vunpack.c.l.b16 %v723
    %v795 = vunpack.c.l.b16 %v724
    %v796 = vunpack.c.l.b16 %v725
    %v797 = vunpack.c.l.b16 %v726
    %v798 = vunpack.c.l.b16 %v727
    %v799 = vunpack.c.l.b16 %v728
    %v800 = vunpack.c.l.b16 %v729
    %v801 = vunpack.c.l.b16 %v730
    %v802 = vpack.c.b16 %v771, %v770
    %v803 = vpack.c.b16 %v773, %v772
    %v804 = vpack.c.b16 %v775, %v774
    %v805 = vpack.c.b16 %v777, %v776
    %v806 = vpack.c.b16 %v779, %v778
    %v807 = vpack.c.b16 %v781, %v780
    %v808 = vpack.c.b16 %v783, %v782
    %v809 = vpack.c.b16 %v785, %v784
    %v810 = vpack.c.b16 %v787, %v786
    %v811 = vpack.c.b16 %v789, %v788
    %v812 = vpack.c.b16 %v791, %v790
    %v813 = vpack.c.b16 %v793, %v792
    %v814 = vpack.c.b16 %v795, %v794
    %v815 = vpack.c.b16 %v797, %v796
    %v816 = vpack.c.b16 %v799, %v798
    %v817 = vpack.c.b16 %v801, %v800
    %834 = vmatprep.subr.bf16.mxu0 0
    %835 = vmatpush1.bf16.msra.mxu0 %v802
    %836 = vmatprep.subr.bf16.mxu0 0
    %837 = vmatpush1.bf16.msra.mxu0 %v803
    %838 = vmatprep.subr.bf16.mxu0 0
    %839 = vmatpush1.bf16.msra.mxu0 %v804
    %840 = vmatprep.subr.bf16.mxu0 0
    %841 = vmatpush1.bf16.msra.mxu0 %v805
    %842 = vmatprep.subr.bf16.mxu0 0
    %843 = vmatpush1.bf16.msra.mxu0 %v806
    %844 = vmatprep.subr.bf16.mxu0 0
    %845 = vmatpush1.bf16.msra.mxu0 %v807
    %846 = vmatprep.subr.bf16.mxu0 0
    %847 = vmatpush1.bf16.msra.mxu0 %v808
    %848 = vmatprep.subr.bf16.mxu0 0
    %849 = vmatpush1.bf16.msra.mxu0 %v809
    %850 = vmatprep.subr.bf16.mxu0 0
    %851 = vmatpush1.bf16.msra.mxu0 %v810
    %852 = vmatprep.subr.bf16.mxu0 0
    %853 = vmatpush1.bf16.msra.mxu0 %v811
    %854 = vmatprep.subr.bf16.mxu0 0
    %855 = vmatpush1.bf16.msra.mxu0 %v812
    %856 = vmatprep.subr.bf16.mxu0 0
    %857 = vmatpush1.bf16.msra.mxu0 %v813
    %858 = vmatprep.subr.bf16.mxu0 0
    %859 = vmatpush1.bf16.msra.mxu0 %v814
    %860 = vmatprep.subr.bf16.mxu0 0
    %861 = vmatpush1.bf16.msra.mxu0 %v815
    %862 = vmatprep.subr.bf16.mxu0 0
    %863 = vmatpush1.bf16.msra.mxu0 %v816
    %864 = vmatprep.subr.bf16.mxu0 0
    %865 = vmatpush1.bf16.msra.mxu0 %v817
    %866 = vmatprep.mubr.bf16.mxu0 %v698
    %867 = vmatmul.mubr.bf16.gmra.mrb[0].mxu0 %v697
    %v868 = vpop.f32.mrb[0].mxu0
    %v869 = vadd.f32 %v736, %v868
    %v870 = vpop.f32.mrb[0].mxu0
    %v871 = vpop.f32.mrb[0].mxu0
    %v872 = vpop.f32.mrb[0].mxu0
    %873 = vdwg.mxu0
    %v874 = vld [vmem:[#allocation22] sm:$0x1]
    %v875 = vld [vmem:[#allocation24] sm:$0x1]
    %876 = vadd.xlane.f32.xlu0 %v869
    %v877 = vpop.xlane.xlu0 %876
    %v878 = vrcp.pop 128.0
    %v879 = vmul.f32 %v877, %v878
    %v880 = vsub.f32 %v869, %v879
    %v881 = vmul.f32 %v880, %v880
    %882 = vadd.xlane.f32.xlu0 %v881
    %v883 = vpop.xlane.xlu0 %882
    %v884 = vmul.f32 %v883, %v878
    %v885 = vadd.f32 %v884, 1e-05
    %v886 = vrsqrt.pop %v885
    %v887 = vmul.f32 %v880, %v886
    %v889 = vlaneseq
    %v890 = vshrl.u32 %v889, 7
    %v891 = vsub.s32 0, %v890
    %v892 = vrot.slane %v874, %v891
    %v894 = vmul.f32 %v887, %v892
    %v896 = vlaneseq
    %v897 = vshrl.u32 %v896, 7
    %v898 = vsub.s32 0, %v897
    %v899 = vrot.slane %v875, %v898
    %v901 = vadd.f32 %v894, %v899
    %v902 = vmax.f32 %v901, 0.0
    %v903 = vpack.c.bf16 %v902, %v902
    %v904 = vld [vmem:[#allocation25] sm:$0xf]
    %v905 = vld [vmem:[#allocation25 + $0x4] sm:$0xf]
    %v906 = vld [vmem:[#allocation25 + $0x8] sm:$0xf]
    %v907 = vld [vmem:[#allocation25 + $0xc] sm:$0xf]
    %v908 = vld [vmem:[#allocation25 + $0x10] sm:$0xf]
    %v909 = vld [vmem:[#allocation25 + $0x14] sm:$0xf]
    %v910 = vld [vmem:[#allocation25 + $0x18] sm:$0xf]
    %v911 = vld [vmem:[#allocation25 + $0x1c] sm:$0xf]
    %v912 = vld [vmem:[#allocation25 + $0x20] sm:$0xf]
    %v913 = vld [vmem:[#allocation25 + $0x24] sm:$0xf]
    %v914 = vld [vmem:[#allocation25 + $0x28] sm:$0xf]
    %v915 = vld [vmem:[#allocation25 + $0x2c] sm:$0xf]
    %v916 = vld [vmem:[#allocation25 + $0x30] sm:$0xf]
    %v917 = vld [vmem:[#allocation25 + $0x34] sm:$0xf]
    %v918 = vld [vmem:[#allocation25 + $0x38] sm:$0xf]
    %v919 = vld [vmem:[#allocation25 + $0x3c] sm:$0xf]
    %v920 = vld [vmem:[#allocation27] sm:$0x1]
    %v922 = vlaneseq
    %v923 = vshrl.u32 %v922, 7
    %v924 = vsub.s32 0, %v923
    %v925 = vrot.slane %v920, %v924
    %v943 = vunpack.c.l.b16 %v904
    %v944 = vunpack.c.l.b16 %v905
    %v945 = vunpack.c.l.b16 %v906
    %v946 = vunpack.c.l.b16 %v907
    %v947 = vunpack.c.l.b16 %v908
    %v948 = vunpack.c.l.b16 %v909
    %v949 = vunpack.c.l.b16 %v910
    %v950 = vunpack.c.l.b16 %v911
    %v951 = vunpack.c.l.b16 %v912
    %v952 = vunpack.c.l.b16 %v913
    %v953 = vunpack.c.l.b16 %v914
    %v954 = vunpack.c.l.b16 %v915
    %v955 = vunpack.c.l.b16 %v916
    %v956 = vunpack.c.l.b16 %v917
    %v957 = vunpack.c.l.b16 %v918
    %v958 = vunpack.c.l.b16 %v919
    %v959 = vpack.c.b16 %v944, %v943
    %v960 = vpack.c.b16 %v946, %v945
    %v961 = vpack.c.b16 %v948, %v947
    %v962 = vpack.c.b16 %v950, %v949
    %v963 = vpack.c.b16 %v952, %v951
    %v964 = vpack.c.b16 %v954, %v953
    %v965 = vpack.c.b16 %v956, %v955
    %v966 = vpack.c.b16 %v958, %v957
    %975 = vmatprep.subr.bf16.mxu0 0
    %976 = vmatpush1.bf16.msra.mxu0 %v959
    %977 = vmatprep.subr.bf16.mxu0 0
    %978 = vmatpush1.bf16.msra.mxu0 %v960
    %979 = vmatprep.subr.bf16.mxu0 0
    %980 = vmatpush1.bf16.msra.mxu0 %v961
    %981 = vmatprep.subr.bf16.mxu0 0
    %982 = vmatpush1.bf16.msra.mxu0 %v962
    %983 = vmatprep.subr.bf16.mxu0 0
    %984 = vmatpush1.bf16.msra.mxu0 %v963
    %985 = vmatprep.subr.bf16.mxu0 0
    %986 = vmatpush1.bf16.msra.mxu0 %v964
    %987 = vmatprep.subr.bf16.mxu0 0
    %988 = vmatpush1.bf16.msra.mxu0 %v965
    %989 = vmatprep.subr.bf16.mxu0 0
    %990 = vmatpush1.bf16.msra.mxu0 %v966
    %991 = vmatprep.subr.bf16.mxu0 0
    %992 = vmatpush1.bf16.msra.mxu0 0
    %993 = vmatprep.subr.bf16.mxu0 0
    %994 = vmatpush1.bf16.msra.mxu0 0
    %995 = vmatprep.subr.bf16.mxu0 0
    %996 = vmatpush1.bf16.msra.mxu0 0
    %997 = vmatprep.subr.bf16.mxu0 0
    %998 = vmatpush1.bf16.msra.mxu0 0
    %999 = vmatprep.subr.bf16.mxu0 0
    %1000 = vmatpush1.bf16.msra.mxu0 0
    %1001 = vmatprep.subr.bf16.mxu0 0
    %1002 = vmatpush1.bf16.msra.mxu0 0
    %1003 = vmatprep.subr.bf16.mxu0 0
    %1004 = vmatpush1.bf16.msra.mxu0 0
    %1005 = vmatprep.subr.bf16.mxu0 0
    %1006 = vmatpush1.bf16.msra.mxu0 0
    %1007 = vmatprep.mubr.bf16.mxu0 0
    %1008 = vmatmul.mubr.bf16.gmra.mrb[0].mxu0 %v903
    %v1009 = vpop.f32.mrb[0].mxu0
    %v1010 = vadd.f32 %v925, %v1009
    %v1011 = vpop.f32.mrb[0].mxu0
    %v1012 = vpop.f32.mrb[0].mxu0
    %v1013 = vpop.f32.mrb[0].mxu0
    %1014 = vdwg.mxu0
    %1015 = vst [vmem:[%s16] sm:$0xff] %v1010
    // Predicated region
    $region133: #{node2vec_classifier_forward.1} parent=1 // pred_check
      _
    $region134: #{node2vec_classifier_forward.1} parent=1 // pred_check_branch
      %1017 = sbr.rel (0) target = $region136
    $region135: #{node2vec_classifier_forward.1} parent=1 // pred_region
      _
    $region136: #{node2vec_classifier_forward.1} parent=1 // pred_fallthru
      _
    // Predicated region
    $region137: #{node2vec_classifier_forward.1} parent=1 // pred_check
      _
    $region138: #{node2vec_classifier_forward.1} parent=1 // pred_check_branch
      %1019 = sbr.rel (0) target = $region140
    $region139: #{node2vec_classifier_forward.1} parent=1 // pred_region
      _
    $region140: #{node2vec_classifier_forward.1} parent=1 // pred_fallthru
      _
    %1020 = vsyncpa [#allocation6], 1
    %1021 = vsyncpa [#allocation8], 1
    %1022 = vsyncpa [#allocation11], 1
    %1023 = vsyncpa [#allocation14], 1
    %1024 = vsyncpa [#allocation17], 1
    %1025 = vsyncpa [#allocation20], 1
    %1026 = vsyncpa [#allocation23], 1
    %1027 = vsyncpa [#allocation26], 1
  %1028 = vsyncmov [#allocation3]
  %s1029 = vpop.sfrf %1028
  %p1030 = scmp.eq.s32.totalorder %s1029, 0
  %p1031 = pneg %p1030
  %1033 = shalt.err (%p1031)
  %s1034 = scalar_lea.sflag [#allocation3], 1
  %1035 = vsyncmov %s1034
  %s1036 = vpop.sfrf %1035
  %p1037 = scmp.eq.s32.totalorder %s1036, 0
  %p1038 = pneg %p1037
  %1040 = shalt.err (%p1038)

</llo_original>
